<compile_context>
chip_gen: v7x
topology: tpu7x:2x2x1
jax: 0.10.0
libtpu: 0.0.40
codegen_flags: <defaults>
</compile_context>

<pallas_src>
import jax
import jax.numpy as jnp
from jax.experimental import pallas as pl
from jax.experimental.pallas import tpu as pltpu

BN_EPS = 1e-5


def _head_kernel(x_ref, w1_ref, b1_ref, w2_ref, b2_ref, out_ref, acc_ref):
    """x @ w1 (K-tiled, f32 accumulate) + b1 -> @ w2 + b2 -> sigmoid.

    BatchNorm (eval) is pre-folded into w1/b1 by the wrapper; Dropout in eval
    mode is identity, so this is a pure two-layer MLP head.
    """
    k = pl.program_id(0)

    @pl.when(k == 0)
    def _():
        acc_ref[...] = jnp.zeros_like(acc_ref)

    # First linear: stream w1 K-tiles. Cast activations to the weight dtype so
    # the MXU consumes them natively (bf16 path); accumulate in f32.
    w1 = w1_ref[...]                                   # (tk, n_feats) bf16/f32
    x = x_ref[...].astype(w1.dtype)                    # (B, tk)
    acc_ref[...] += jnp.dot(x, w1, preferred_element_type=jnp.float32)

    @pl.when(k == pl.num_programs(0) - 1)
    def _():
        h = acc_ref[...] + b1_ref[...]                 # (B, n_feats) f32
        logits = jnp.dot(h, w2_ref[...],
                         preferred_element_type=jnp.float32) + b2_ref[...]
        out_ref[...] = jax.nn.sigmoid(logits).astype(out_ref.dtype)


def _fold_bn_into_linear(params):
    """Fold eval-mode BatchNorm1d into the first Linear (done once, in f32)."""
    scale = params["bn_gamma"] * jax.lax.rsqrt(params["bn_var"] + BN_EPS)  # (F,)
    shift = params["bn_beta"] - params["bn_mean"] * scale                  # (F,)
    w1 = params["w1"] * scale[:, None]                                     # (F, n_feats)
    b1 = params["b1"] + shift @ params["w1"]                               # (n_feats,)
    return w1, b1


def _choose_tk(F, B, n_feats, weight_itemsize, vmem_budget_bytes=24 << 20):
    """Largest K tile (multiple of 128) whose double-buffered w1+x tiles fit."""
    # Per unit of tk: double-buffered w1 tile (tk, n_feats) in weight dtype and
    # double-buffered x tile (B, tk) in f32.
    bytes_per_k = 2 * (n_feats * weight_itemsize + B * 4)
    max_tk = max(128, (vmem_budget_bytes // bytes_per_k) // 128 * 128)
    tk = min(pl.cdiv(F, 128) * 128, max_tk)
    return int(tk)


def net_head_forward(x_nchw, params, *, tk=None, weight_dtype=jnp.bfloat16):
    """x_nchw: (B, C, H, W) float32. Returns (B, num_classes) sigmoid outputs."""
    B = x_nchw.shape[0]
    x = x_nchw.reshape(B, -1).astype(jnp.float32)      # Flatten (torch .view)
    F = x.shape[1]

    # One-time parameter prep (offline-able): fold BN, cast the dominant stream.
    w1, b1 = _fold_bn_into_linear(params)
    w1 = w1.astype(weight_dtype)                       # (F, n_feats): only big stream
    b1 = b1.reshape(1, -1).astype(jnp.float32)
    w2 = params["w2"].astype(jnp.float32)              # tiny — keep f32 for accuracy
    b2 = params["b2"].reshape(1, -1).astype(jnp.float32)

    n_feats = w1.shape[1]
    num_classes = w2.shape[1]

    if tk is None:
        tk = _choose_tk(F, B, n_feats, jnp.dtype(weight_dtype).itemsize)
    assert tk % 128 == 0, "tk must be a multiple of 128 (lane width)"

    # Pad the feature axis to a multiple of tk. Padded w1 rows are zero, so the
    # accumulation is exact regardless of the padded x values.
    F_pad = pl.cdiv(F, tk) * tk
    if F_pad != F:
        x = jnp.pad(x, ((0, 0), (0, F_pad - F)))
        w1 = jnp.pad(w1, ((0, F_pad - F), (0, 0)))
    kt = F_pad // tk

    flops = 2 * B * F_pad * n_feats + 2 * B * n_feats * num_classes
    bytes_accessed = int(
        x.size * x.dtype.itemsize + w1.size * w1.dtype.itemsize
        + b1.size * 4 + w2.size * 4 + b2.size * 4 + B * num_classes * 4)

    out = pl.pallas_call(
        _head_kernel,
        out_shape=jax.ShapeDtypeStruct((B, num_classes), jnp.float32),
        grid_spec=pltpu.PrefetchScalarGridSpec(
            num_scalar_prefetch=0,
            grid=(kt,),
            in_specs=[
                pl.BlockSpec((B, tk), lambda k: (0, k)),                  # x (K-tiled)
                pl.BlockSpec((tk, n_feats), lambda k: (k, 0)),            # w1 (streamed)
                pl.BlockSpec((1, n_feats), lambda k: (0, 0)),             # b1 (resident)
                pl.BlockSpec((n_feats, num_classes), lambda k: (0, 0)),   # w2 (resident)
                pl.BlockSpec((1, num_classes), lambda k: (0, 0)),         # b2 (resident)
            ],
            out_specs=pl.BlockSpec((B, num_classes), lambda k: (0, 0)),
            scratch_shapes=[pltpu.VMEM((B, n_feats), jnp.float32)],
        ),
        compiler_params=pltpu.CompilerParams(
            dimension_semantics=("arbitrary",),       # K axis is a reduction
            vmem_limit_bytes=32 * 1024 * 1024,        # covers big tiles on v5e too
        ),
        cost_estimate=pl.CostEstimate(
            flops=flops,
            transcendentals=B * num_classes,
            bytes_accessed=bytes_accessed,
        ),
    )(x, w1, b1, w2, b2)
    return out


def make_params(key, F, n_feats, num_classes):
    k1, k2, k3, k4, k5, k6 = jax.random.split(key, 6)
    return {
        # BatchNorm1d(F): gamma, beta, running stats (eval mode)
        "bn_gamma": jnp.ones((F,), jnp.float32),
        "bn_beta": jnp.zeros((F,), jnp.float32),
        "bn_mean": jax.random.normal(k5, (F,), jnp.float32) * 0.1,
        "bn_var": jnp.abs(jax.random.normal(k6, (F,), jnp.float32)) * 0.1 + 1.0,
        # Linear(F, n_feats)
        "w1": jax.random.normal(k1, (F, n_feats), jnp.float32) * 0.02,
        "b1": jax.random.normal(k2, (n_feats,), jnp.float32) * 0.01,
        # Linear(n_feats, num_classes)
        "w2": jax.random.normal(k3, (n_feats, num_classes), jnp.float32) * 0.05,
        "b2": jax.random.normal(k4, (num_classes,), jnp.float32) * 0.01,
    }


def reference_forward(x_nchw, params):
    """Exact f32 semantics of the PyTorch head (eval mode; Dropout = identity)."""
    B = x_nchw.shape[0]
    x = x_nchw.reshape(B, -1)
    xn = (x - params["bn_mean"]) * jax.lax.rsqrt(params["bn_var"] + BN_EPS)
    xn = xn * params["bn_gamma"] + params["bn_beta"]
    h = xn @ params["w1"] + params["b1"]
    logits = h @ params["w2"] + params["b2"]
    return jax.nn.sigmoid(logits)


def reference_forward_kernel_path(x_nchw, params):
    """Same math as the kernel (folded BN, bf16 w1 / bf16 activations, f32 accum)."""
    B = x_nchw.shape[0]
    x = x_nchw.reshape(B, -1)
    w1, b1 = _fold_bn_into_linear(params)
    w1 = w1.astype(jnp.bfloat16).astype(jnp.float32)
    xb = x.astype(jnp.bfloat16).astype(jnp.float32)
    h = xb @ w1 + b1
    logits = h @ params["w2"] + params["b2"]
    return jax.nn.sigmoid(logits)


if __name__ == "__main__":
    # Small shapes consistent with the module's head (scaled down from F=81536):
    B, C, H, W = 2, 8, 16, 16        # F = 2048 flattened features
    n_feats, num_classes = 128, 4

    key = jax.random.PRNGKey(0)
    kx, kp = jax.random.split(key)
    x = jax.random.normal(kx, (B, C, H, W), jnp.float32)
    params = make_params(kp, C * H * W, n_feats, num_classes)

    out = jax.block_until_ready(net_head_forward(x, params))
    assert out.shape == (B, num_classes)

    ref_exact = reference_forward(x, params)                   # f32 module semantics
    ref_kernel = reference_forward_kernel_path(x, params)      # kernel-path numerics
    assert jnp.allclose(out, ref_kernel, atol=2e-3, rtol=2e-3), \
        "mismatch vs kernel-path (bf16) reference"
    assert jnp.allclose(out, ref_exact, atol=2e-2, rtol=2e-2), \
        "mismatch vs exact f32 reference"
    print("KERNEL_OK")
</pallas_src>

<mosaic_0001>
module attributes {stable_mosaic.version = 11 : i64} {
  func.func @_head_kernel(%arg0: i32, %arg1: memref<2x2048xf32, #tpu.memory_space<vmem>>, %arg2: memref<2048x128xbf16, #tpu.memory_space<vmem>>, %arg3: memref<1x128xf32, #tpu.memory_space<vmem>>, %arg4: memref<128x4xf32, #tpu.memory_space<vmem>>, %arg5: memref<1x4xf32, #tpu.memory_space<vmem>>, %arg6: memref<2x4xf32, #tpu.memory_space<vmem>>, %arg7: memref<2x128xf32, #tpu.memory_space<vmem>>) attributes {dimension_semantics = [#tpu.dimension_semantics<arbitrary>], iteration_bounds = array<i64: 1>, scalar_prefetch = 0 : i64, scratch_operands = 1 : i64, tpu.core_type = #tpu.core_type<tc>, window_params = [{transform_indices = @transform_0, window_bounds = array<i64: 2, 2048>}, {transform_indices = @transform_1, window_bounds = array<i64: 2048, 128>}, {pipeline_mode = #tpu.pipeline_mode<synchronous>, transform_indices = @transform_2, window_bounds = array<i64: 1, 128>}, {pipeline_mode = #tpu.pipeline_mode<synchronous>, transform_indices = @transform_3, window_bounds = array<i64: 128, 4>}, {pipeline_mode = #tpu.pipeline_mode<synchronous>, transform_indices = @transform_4, window_bounds = array<i64: 1, 4>}, {pipeline_mode = #tpu.pipeline_mode<synchronous>, transform_indices = @transform_5, window_bounds = array<i64: 2, 4>}]} {
    %c0_i32 = arith.constant 0 : i32
    %0 = arith.cmpi eq, %arg0, %c0_i32 : i32
    %1 = arith.extui %0 : i1 to i32
    %c0_i32_0 = arith.constant 0 : i32
    %2 = arith.cmpi ne, %1, %c0_i32_0 : i32
    scf.if %2 {
      %cst_10 = arith.constant 0.000000e+00 : f32
      %13 = vector.broadcast %cst_10 : f32 to vector<2x128xf32>
      %c0_11 = arith.constant 0 : index
      %c0_12 = arith.constant 0 : index
      %14 = vector.load %arg7[%c0_11, %c0_12] : memref<2x128xf32, #tpu.memory_space<vmem>>, vector<2x128xf32>
      tpu.vector_store %arg7[%c0_11, %c0_12], %13 {strides = array<i32>} : memref<2x128xf32, #tpu.memory_space<vmem>>, vector<2x128xf32>,
    } else {
    }
    %c0 = arith.constant 0 : index
    %c0_1 = arith.constant 0 : index
    %3 = vector.load %arg2[%c0, %c0_1] : memref<2048x128xbf16, #tpu.memory_space<vmem>>, vector<2048x128xbf16>
    %c0_2 = arith.constant 0 : index
    %c0_3 = arith.constant 0 : index
    %4 = vector.load %arg1[%c0_2, %c0_3] : memref<2x2048xf32, #tpu.memory_space<vmem>>, vector<2x2048xf32>
    %5 = arith.truncf %4 : vector<2x2048xf32> to vector<2x2048xbf16>
    %c0_4 = arith.constant 0 : index
    %c0_5 = arith.constant 0 : index
    %6 = vector.load %arg7[%c0_4, %c0_5] : memref<2x128xf32, #tpu.memory_space<vmem>>, vector<2x128xf32>
    %cst = arith.constant dense<0.000000e+00> : vector<2x128xf32>
    %7 = tpu.matmul %5, %3, %cst {dimension_numbers = #tpu.dot_dimension_numbers<[1], [0], [0], [1], [0, 0, 1, 1], [], []>} : vector<2x2048xbf16>, vector<2048x128xbf16>, vector<2x128xf32> -> vector<2x128xf32>
    %8 = arith.addf %6, %7 : vector<2x128xf32>
    %c0_6 = arith.constant 0 : index
    %c0_7 = arith.constant 0 : index
    %9 = vector.load %arg7[%c0_6, %c0_7] : memref<2x128xf32, #tpu.memory_space<vmem>>, vector<2x128xf32>
    tpu.vector_store %arg7[%c0_6, %c0_7], %8 {strides = array<i32>} : memref<2x128xf32, #tpu.memory_space<vmem>>, vector<2x128xf32>,
    %c0_i32_8 = arith.constant 0 : i32
    %10 = arith.cmpi eq, %arg0, %c0_i32_8 : i32
    %11 = arith.extui %10 : i1 to i32
    %c0_i32_9 = arith.constant 0 : i32
    %12 = arith.cmpi ne, %11, %c0_i32_9 : i32
    scf.if %12 {
      %c0_10 = arith.constant 0 : index
      %c0_11 = arith.constant 0 : index
      %13 = vector.load %arg7[%c0_10, %c0_11] : memref<2x128xf32, #tpu.memory_space<vmem>>, vector<2x128xf32>
      %c0_12 = arith.constant 0 : index
      %c0_13 = arith.constant 0 : index
      %14 = vector.load %arg3[%c0_12, %c0_13] : memref<1x128xf32, #tpu.memory_space<vmem>>, vector<1x128xf32>
      %15 = vector.broadcast %14 : vector<1x128xf32> to vector<2x128xf32>
      %16 = arith.addf %13, %15 : vector<2x128xf32>
      %c0_14 = arith.constant 0 : index
      %c0_15 = arith.constant 0 : index
      %17 = vector.load %arg4[%c0_14, %c0_15] : memref<128x4xf32, #tpu.memory_space<vmem>>, vector<128x4xf32>
      %cst_16 = arith.constant dense<0.000000e+00> : vector<2x4xf32>
      %18 = tpu.matmul %16, %17, %cst_16 {dimension_numbers = #tpu.dot_dimension_numbers<[1], [0], [0], [1], [0, 0, 1, 1], [], []>} : vector<2x128xf32>, vector<128x4xf32>, vector<2x4xf32> -> vector<2x4xf32>
      %c0_17 = arith.constant 0 : index
      %c0_18 = arith.constant 0 : index
      %19 = vector.load %arg5[%c0_17, %c0_18] : memref<1x4xf32, #tpu.memory_space<vmem>>, vector<1x4xf32>
      %20 = vector.broadcast %19 : vector<1x4xf32> to vector<2x4xf32>
      %21 = arith.addf %18, %20 : vector<2x4xf32>
      %22 = arith.negf %21 : vector<2x4xf32>
      %23 = math.exp %22 : vector<2x4xf32>
      %cst_19 = arith.constant 1.000000e+00 : f32
      %24 = vector.broadcast %cst_19 : f32 to vector<2x4xf32>
      %25 = arith.addf %24, %23 : vector<2x4xf32>
      %26 = arith.divf %24, %25 : vector<2x4xf32>
      %c0_20 = arith.constant 0 : index
      %c0_21 = arith.constant 0 : index
      %27 = vector.load %arg6[%c0_20, %c0_21] : memref<2x4xf32, #tpu.memory_space<vmem>>, vector<2x4xf32>
      tpu.vector_store %arg6[%c0_20, %c0_21], %26 {strides = array<i32>} : memref<2x4xf32, #tpu.memory_space<vmem>>, vector<2x4xf32>,
    } else {
    }
    return
  }
  func.func @transform_0(%arg0: i32) -> (i32, i32) {
    %c0_i32 = arith.constant 0 : i32
    %c0_i32_0 = arith.constant 0 : i32
    return %c0_i32, %arg0 : i32, i32
  }
  func.func @transform_1(%arg0: i32) -> (i32, i32) {
    %c0_i32 = arith.constant 0 : i32
    %c0_i32_0 = arith.constant 0 : i32
    return %arg0, %c0_i32 : i32, i32
  }
  func.func @transform_2(%arg0: i32) -> (i32, i32) {
    %c0_i32 = arith.constant 0 : i32
    %c0_i32_0 = arith.constant 0 : i32
    %c0_i32_1 = arith.constant 0 : i32
    return %c0_i32, %c0_i32_0 : i32, i32
  }
  func.func @transform_3(%arg0: i32) -> (i32, i32) {
    %c0_i32 = arith.constant 0 : i32
    %c0_i32_0 = arith.constant 0 : i32
    %c0_i32_1 = arith.constant 0 : i32
    return %c0_i32, %c0_i32_0 : i32, i32
  }
  func.func @transform_4(%arg0: i32) -> (i32, i32) {
    %c0_i32 = arith.constant 0 : i32
    %c0_i32_0 = arith.constant 0 : i32
    %c0_i32_1 = arith.constant 0 : i32
    return %c0_i32, %c0_i32_0 : i32, i32
  }
  func.func @transform_5(%arg0: i32) -> (i32, i32) {
    %c0_i32 = arith.constant 0 : i32
    %c0_i32_0 = arith.constant 0 : i32
    %c0_i32_1 = arith.constant 0 : i32
    return %c0_i32, %c0_i32_0 : i32, i32
  }
}

</mosaic_0001>

<llo_original>
// kernel: tpu_custom_call.1
$region0: #{tpu_custom_call.1}
  #allocation0 [shape = 'u32[]', space=smem, size = 0x4, offset = 0x4, fixed_abs, tag = 'smem constant byte address 0x4 - core index']
  #allocation1 [shape = 'u32[144,128]{1,0:T(1,128)}', space=vmem, size = 0x12000, scoped, tag = 'internal scratch']
  #allocation2 [shape = 'f32[2,128]{1,0:T(2,128)}', space=vmem, size = 0x400, scoped, tag = 'scratch operand']
  %s0 = inlined_call_operand.vmem [shape: f32[2,2048], index: 0, kind: input, shape index: {}]
  %s1 = inlined_call_operand.hbm [shape: bf16[2048,128], index: 1, kind: input, shape index: {}]
  %s2 = inlined_call_operand.vmem [shape: f32[1,128], index: 2, kind: input, shape index: {}]
  %s3 = inlined_call_operand.vmem [shape: f32[128,4], index: 3, kind: input, shape index: {}]
  %s4 = inlined_call_operand.vmem [shape: f32[1,4], index: 4, kind: input, shape index: {}]
  %s5 = inlined_call_operand.hbm [shape: f32[2,4], index: 5, kind: output, shape index: {}]
  %s6 = sld [smem:[#allocation0]]
  $region42: #{tpu_custom_call.1} parent=0
    _
  %s8 = ssub.s32 1, %s6
  %s9 = scalar_select 0, %s8, %s6
  $region1: #{tpu_custom_call.1} parent=0
    #allocation3 [shape = 'u8[524288]{0}', space=vmem, size = 0x80000, scoped, tag = 'input window, operand 1, single buffered']
    #allocation4 [shape = 's32[1]{0}', space=sflag, size = 0x4, scoped, tag = 'scoped memory for tpu_custom_call.1']
    #allocation5 [shape = 's32[1]{0}', space=sflag, size = 0x4, scoped, tag = 'scoped memory for tpu_custom_call.1']
    #allocation6 [shape = 'u8[1024]{0}', space=vmem, size = 0x400, scoped, tag = 'output window, operand 0, single buffered']
    %10 = vsyncpa [#allocation4], 0
    %11 = vsyncpa [#allocation5], 0
    // Predicated region
    $region2: #{tpu_custom_call.1} parent=1 // pred_check
      _
    $region3: #{tpu_custom_call.1} parent=1 // pred_check_branch
      %13 = sbr.rel (0) target = $region5
    $region4: #{tpu_custom_call.1} parent=1 // pred_region
      _
    $region5: #{tpu_custom_call.1} parent=1 // pred_fallthru
      _
    // Predicated region
    $region6: #{tpu_custom_call.1} parent=1 // pred_check
      _
    $region7: #{tpu_custom_call.1} parent=1 // pred_check_branch
      %15 = sbr.rel (0) target = $region9
    $region8: #{tpu_custom_call.1} parent=1 // pred_region
      %s17 = ssub.s32 16384, 16384
      %18 = vsyncadd [#allocation4], %s17
      %s19 = sshll.u32 [#allocation3], 4
      %s20 = int_to_ptr.vmem [resolvable:$true] %s19
      %25 = dma.hbm_to_vmem [thread:$0]  %s1, 16384, %s20, [#allocation4], 64, 64, 4
    $region9: #{tpu_custom_call.1} parent=1 // pred_fallthru
      _
    // Predicated region
    $region10: #{tpu_custom_call.1} parent=1 // pred_check
      _
    $region11: #{tpu_custom_call.1} parent=1 // pred_check_branch
      %27 = sbr.rel (0) target = $region13
    $region12: #{tpu_custom_call.1} parent=1 // pred_region
      _
    $region13: #{tpu_custom_call.1} parent=1 // pred_fallthru
      _
    // Predicated region
    $region14: #{tpu_custom_call.1} parent=1 // pred_check
      _
    $region15: #{tpu_custom_call.1} parent=1 // pred_check_branch
      %29 = sbr.rel (0) target = $region17
    $region16: #{tpu_custom_call.1} parent=1 // pred_region
      _
    $region17: #{tpu_custom_call.1} parent=1 // pred_fallthru
      _
    // Predicated region
    $region18: #{tpu_custom_call.1} parent=1 // pred_check
      _
    $region19: #{tpu_custom_call.1} parent=1 // pred_check_branch
      %31 = sbr.rel (0) target = $region21
    $region20: #{tpu_custom_call.1} parent=1 // pred_region
      _
    $region21: #{tpu_custom_call.1} parent=1 // pred_fallthru
      _
    // Predicated region
    $region22: #{tpu_custom_call.1} parent=1 // pred_check
      _
    $region23: #{tpu_custom_call.1} parent=1 // pred_check_branch
      %33 = sbr.rel (0) target = $region25
    $region24: #{tpu_custom_call.1} parent=1 // pred_region
      %34 = dma.done [#allocation4], 16384
    $region25: #{tpu_custom_call.1} parent=1 // pred_fallthru
      _
    %p36 = scmp.eq.s32.totalorder 0, 0
    // Predicated region
    $region26: #{tpu_custom_call.1} parent=1 // pred_check
      %p37 = pneg %p36
    $region27: #{tpu_custom_call.1} parent=1 // pred_check_branch
      %39 = sbr.rel (%p37) target = $region29
    $region28: #{tpu_custom_call.1} parent=1 // pred_region
      %40 = vst [vmem:[#allocation2] sm:$0x3] 0.0
    $region29: #{tpu_custom_call.1} parent=1 // pred_fallthru
      _
    %v41 = vld [vmem:[#allocation3] sm:$0xf]
    %v42 = vld [vmem:[#allocation3 + $0x4] sm:$0xf]
    %v43 = vld [vmem:[#allocation3 + $0x8] sm:$0xf]
    %v44 = vld [vmem:[#allocation3 + $0xc] sm:$0xf]
    %v45 = vld [vmem:[#allocation3 + $0x10] sm:$0xf]
    %v46 = vld [vmem:[#allocation3 + $0x14] sm:$0xf]
    %v47 = vld [vmem:[#allocation3 + $0x18] sm:$0xf]
    %v48 = vld [vmem:[#allocation3 + $0x1c] sm:$0xf]
    %v49 = vld [vmem:[#allocation3 + $0x20] sm:$0xf]
    %v50 = vld [vmem:[#allocation3 + $0x24] sm:$0xf]
    %v51 = vld [vmem:[#allocation3 + $0x28] sm:$0xf]
    %v52 = vld [vmem:[#allocation3 + $0x2c] sm:$0xf]
    %v53 = vld [vmem:[#allocation3 + $0x30] sm:$0xf]
    %v54 = vld [vmem:[#allocation3 + $0x34] sm:$0xf]
    %v55 = vld [vmem:[#allocation3 + $0x38] sm:$0xf]
    %v56 = vld [vmem:[#allocation3 + $0x3c] sm:$0xf]
    %v57 = vld [vmem:[#allocation3 + $0x40] sm:$0xf]
    %v58 = vld [vmem:[#allocation3 + $0x44] sm:$0xf]
    %v59 = vld [vmem:[#allocation3 + $0x48] sm:$0xf]
    %v60 = vld [vmem:[#allocation3 + $0x4c] sm:$0xf]
    %v61 = vld [vmem:[#allocation3 + $0x50] sm:$0xf]
    %v62 = vld [vmem:[#allocation3 + $0x54] sm:$0xf]
    %v63 = vld [vmem:[#allocation3 + $0x58] sm:$0xf]
    %v64 = vld [vmem:[#allocation3 + $0x5c] sm:$0xf]
    %v65 = vld [vmem:[#allocation3 + $0x60] sm:$0xf]
    %v66 = vld [vmem:[#allocation3 + $0x64] sm:$0xf]
    %v67 = vld [vmem:[#allocation3 + $0x68] sm:$0xf]
    %v68 = vld [vmem:[#allocation3 + $0x6c] sm:$0xf]
    %v69 = vld [vmem:[#allocation3 + $0x70] sm:$0xf]
    %v70 = vld [vmem:[#allocation3 + $0x74] sm:$0xf]
    %v71 = vld [vmem:[#allocation3 + $0x78] sm:$0xf]
    %v72 = vld [vmem:[#allocation3 + $0x7c] sm:$0xf]
    %v73 = vld [vmem:[#allocation3 + $0x80] sm:$0xf]
    %v74 = vld [vmem:[#allocation3 + $0x84] sm:$0xf]
    %v75 = vld [vmem:[#allocation3 + $0x88] sm:$0xf]
    %v76 = vld [vmem:[#allocation3 + $0x8c] sm:$0xf]
    %v77 = vld [vmem:[#allocation3 + $0x90] sm:$0xf]
    %v78 = vld [vmem:[#allocation3 + $0x94] sm:$0xf]
    %v79 = vld [vmem:[#allocation3 + $0x98] sm:$0xf]
    %v80 = vld [vmem:[#allocation3 + $0x9c] sm:$0xf]
    %v81 = vld [vmem:[#allocation3 + $0xa0] sm:$0xf]
    %v82 = vld [vmem:[#allocation3 + $0xa4] sm:$0xf]
    %v83 = vld [vmem:[#allocation3 + $0xa8] sm:$0xf]
    %v84 = vld [vmem:[#allocation3 + $0xac] sm:$0xf]
    %v85 = vld [vmem:[#allocation3 + $0xb0] sm:$0xf]
    %v86 = vld [vmem:[#allocation3 + $0xb4] sm:$0xf]
    %v87 = vld [vmem:[#allocation3 + $0xb8] sm:$0xf]
    %v88 = vld [vmem:[#allocation3 + $0xbc] sm:$0xf]
    %v89 = vld [vmem:[#allocation3 + $0xc0] sm:$0xf]
    %v90 = vld [vmem:[#allocation3 + $0xc4] sm:$0xf]
    %v91 = vld [vmem:[#allocation3 + $0xc8] sm:$0xf]
    %v92 = vld [vmem:[#allocation3 + $0xcc] sm:$0xf]
    %v93 = vld [vmem:[#allocation3 + $0xd0] sm:$0xf]
    %v94 = vld [vmem:[#allocation3 + $0xd4] sm:$0xf]
    %v95 = vld [vmem:[#allocation3 + $0xd8] sm:$0xf]
    %v96 = vld [vmem:[#allocation3 + $0xdc] sm:$0xf]
    %v97 = vld [vmem:[#allocation3 + $0xe0] sm:$0xf]
    %v98 = vld [vmem:[#allocation3 + $0xe4] sm:$0xf]
    %v99 = vld [vmem:[#allocation3 + $0xe8] sm:$0xf]
    %v100 = vld [vmem:[#allocation3 + $0xec] sm:$0xf]
    %v101 = vld [vmem:[#allocation3 + $0xf0] sm:$0xf]
    %v102 = vld [vmem:[#allocation3 + $0xf4] sm:$0xf]
    %v103 = vld [vmem:[#allocation3 + $0xf8] sm:$0xf]
    %v104 = vld [vmem:[#allocation3 + $0xfc] sm:$0xf]
    %v105 = vld [vmem:[#allocation3 + $0x100] sm:$0xf]
    %v106 = vld [vmem:[#allocation3 + $0x104] sm:$0xf]
    %v107 = vld [vmem:[#allocation3 + $0x108] sm:$0xf]
    %v108 = vld [vmem:[#allocation3 + $0x10c] sm:$0xf]
    %v109 = vld [vmem:[#allocation3 + $0x110] sm:$0xf]
    %v110 = vld [vmem:[#allocation3 + $0x114] sm:$0xf]
    %v111 = vld [vmem:[#allocation3 + $0x118] sm:$0xf]
    %v112 = vld [vmem:[#allocation3 + $0x11c] sm:$0xf]
    %v113 = vld [vmem:[#allocation3 + $0x120] sm:$0xf]
    %v114 = vld [vmem:[#allocation3 + $0x124] sm:$0xf]
    %v115 = vld [vmem:[#allocation3 + $0x128] sm:$0xf]
    %v116 = vld [vmem:[#allocation3 + $0x12c] sm:$0xf]
    %v117 = vld [vmem:[#allocation3 + $0x130] sm:$0xf]
    %v118 = vld [vmem:[#allocation3 + $0x134] sm:$0xf]
    %v119 = vld [vmem:[#allocation3 + $0x138] sm:$0xf]
    %v120 = vld [vmem:[#allocation3 + $0x13c] sm:$0xf]
    %v121 = vld [vmem:[#allocation3 + $0x140] sm:$0xf]
    %v122 = vld [vmem:[#allocation3 + $0x144] sm:$0xf]
    %v123 = vld [vmem:[#allocation3 + $0x148] sm:$0xf]
    %v124 = vld [vmem:[#allocation3 + $0x14c] sm:$0xf]
    %v125 = vld [vmem:[#allocation3 + $0x150] sm:$0xf]
    %v126 = vld [vmem:[#allocation3 + $0x154] sm:$0xf]
    %v127 = vld [vmem:[#allocation3 + $0x158] sm:$0xf]
    %v128 = vld [vmem:[#allocation3 + $0x15c] sm:$0xf]
    %v129 = vld [vmem:[#allocation3 + $0x160] sm:$0xf]
    %v130 = vld [vmem:[#allocation3 + $0x164] sm:$0xf]
    %v131 = vld [vmem:[#allocation3 + $0x168] sm:$0xf]
    %v132 = vld [vmem:[#allocation3 + $0x16c] sm:$0xf]
    %v133 = vld [vmem:[#allocation3 + $0x170] sm:$0xf]
    %v134 = vld [vmem:[#allocation3 + $0x174] sm:$0xf]
    %v135 = vld [vmem:[#allocation3 + $0x178] sm:$0xf]
    %v136 = vld [vmem:[#allocation3 + $0x17c] sm:$0xf]
    %v137 = vld [vmem:[#allocation3 + $0x180] sm:$0xf]
    %v138 = vld [vmem:[#allocation3 + $0x184] sm:$0xf]
    %v139 = vld [vmem:[#allocation3 + $0x188] sm:$0xf]
    %v140 = vld [vmem:[#allocation3 + $0x18c] sm:$0xf]
    %v141 = vld [vmem:[#allocation3 + $0x190] sm:$0xf]
    %v142 = vld [vmem:[#allocation3 + $0x194] sm:$0xf]
    %v143 = vld [vmem:[#allocation3 + $0x198] sm:$0xf]
    %v144 = vld [vmem:[#allocation3 + $0x19c] sm:$0xf]
    %v145 = vld [vmem:[#allocation3 + $0x1a0] sm:$0xf]
    %v146 = vld [vmem:[#allocation3 + $0x1a4] sm:$0xf]
    %v147 = vld [vmem:[#allocation3 + $0x1a8] sm:$0xf]
    %v148 = vld [vmem:[#allocation3 + $0x1ac] sm:$0xf]
    %v149 = vld [vmem:[#allocation3 + $0x1b0] sm:$0xf]
    %v150 = vld [vmem:[#allocation3 + $0x1b4] sm:$0xf]
    %v151 = vld [vmem:[#allocation3 + $0x1b8] sm:$0xf]
    %v152 = vld [vmem:[#allocation3 + $0x1bc] sm:$0xf]
    %v153 = vld [vmem:[#allocation3 + $0x1c0] sm:$0xf]
    %v154 = vld [vmem:[#allocation3 + $0x1c4] sm:$0xf]
    %v155 = vld [vmem:[#allocation3 + $0x1c8] sm:$0xf]
    %v156 = vld [vmem:[#allocation3 + $0x1cc] sm:$0xf]
    %v157 = vld [vmem:[#allocation3 + $0x1d0] sm:$0xf]
    %v158 = vld [vmem:[#allocation3 + $0x1d4] sm:$0xf]
    %v159 = vld [vmem:[#allocation3 + $0x1d8] sm:$0xf]
    %v160 = vld [vmem:[#allocation3 + $0x1dc] sm:$0xf]
    %v161 = vld [vmem:[#allocation3 + $0x1e0] sm:$0xf]
    %v162 = vld [vmem:[#allocation3 + $0x1e4] sm:$0xf]
    %v163 = vld [vmem:[#allocation3 + $0x1e8] sm:$0xf]
    %v164 = vld [vmem:[#allocation3 + $0x1ec] sm:$0xf]
    %v165 = vld [vmem:[#allocation3 + $0x1f0] sm:$0xf]
    %v166 = vld [vmem:[#allocation3 + $0x1f4] sm:$0xf]
    %v167 = vld [vmem:[#allocation3 + $0x1f8] sm:$0xf]
    %v168 = vld [vmem:[#allocation3 + $0x1fc] sm:$0xf]
    %v169 = vld [vmem:[#allocation3 + $0x200] sm:$0xf]
    %v170 = vld [vmem:[#allocation3 + $0x204] sm:$0xf]
    %v171 = vld [vmem:[#allocation3 + $0x208] sm:$0xf]
    %v172 = vld [vmem:[#allocation3 + $0x20c] sm:$0xf]
    %v173 = vld [vmem:[#allocation3 + $0x210] sm:$0xf]
    %v174 = vld [vmem:[#allocation3 + $0x214] sm:$0xf]
    %v175 = vld [vmem:[#allocation3 + $0x218] sm:$0xf]
    %v176 = vld [vmem:[#allocation3 + $0x21c] sm:$0xf]
    %v177 = vld [vmem:[#allocation3 + $0x220] sm:$0xf]
    %v178 = vld [vmem:[#allocation3 + $0x224] sm:$0xf]
    %v179 = vld [vmem:[#allocation3 + $0x228] sm:$0xf]
    %v180 = vld [vmem:[#allocation3 + $0x22c] sm:$0xf]
    %v181 = vld [vmem:[#allocation3 + $0x230] sm:$0xf]
    %v182 = vld [vmem:[#allocation3 + $0x234] sm:$0xf]
    %v183 = vld [vmem:[#allocation3 + $0x238] sm:$0xf]
    %v184 = vld [vmem:[#allocation3 + $0x23c] sm:$0xf]
    %v185 = vld [vmem:[#allocation3 + $0x240] sm:$0xf]
    %v186 = vld [vmem:[#allocation3 + $0x244] sm:$0xf]
    %v187 = vld [vmem:[#allocation3 + $0x248] sm:$0xf]
    %v188 = vld [vmem:[#allocation3 + $0x24c] sm:$0xf]
    %v189 = vld [vmem:[#allocation3 + $0x250] sm:$0xf]
    %v190 = vld [vmem:[#allocation3 + $0x254] sm:$0xf]
    %v191 = vld [vmem:[#allocation3 + $0x258] sm:$0xf]
    %v192 = vld [vmem:[#allocation3 + $0x25c] sm:$0xf]
    %v193 = vld [vmem:[#allocation3 + $0x260] sm:$0xf]
    %v194 = vld [vmem:[#allocation3 + $0x264] sm:$0xf]
    %v195 = vld [vmem:[#allocation3 + $0x268] sm:$0xf]
    %v196 = vld [vmem:[#allocation3 + $0x26c] sm:$0xf]
    %v197 = vld [vmem:[#allocation3 + $0x270] sm:$0xf]
    %v198 = vld [vmem:[#allocation3 + $0x274] sm:$0xf]
    %v199 = vld [vmem:[#allocation3 + $0x278] sm:$0xf]
    %v200 = vld [vmem:[#allocation3 + $0x27c] sm:$0xf]
    %v201 = vld [vmem:[#allocation3 + $0x280] sm:$0xf]
    %v202 = vld [vmem:[#allocation3 + $0x284] sm:$0xf]
    %v203 = vld [vmem:[#allocation3 + $0x288] sm:$0xf]
    %v204 = vld [vmem:[#allocation3 + $0x28c] sm:$0xf]
    %v205 = vld [vmem:[#allocation3 + $0x290] sm:$0xf]
    %v206 = vld [vmem:[#allocation3 + $0x294] sm:$0xf]
    %v207 = vld [vmem:[#allocation3 + $0x298] sm:$0xf]
    %v208 = vld [vmem:[#allocation3 + $0x29c] sm:$0xf]
    %v209 = vld [vmem:[#allocation3 + $0x2a0] sm:$0xf]
    %v210 = vld [vmem:[#allocation3 + $0x2a4] sm:$0xf]
    %v211 = vld [vmem:[#allocation3 + $0x2a8] sm:$0xf]
    %v212 = vld [vmem:[#allocation3 + $0x2ac] sm:$0xf]
    %v213 = vld [vmem:[#allocation3 + $0x2b0] sm:$0xf]
    %v214 = vld [vmem:[#allocation3 + $0x2b4] sm:$0xf]
    %v215 = vld [vmem:[#allocation3 + $0x2b8] sm:$0xf]
    %v216 = vld [vmem:[#allocation3 + $0x2bc] sm:$0xf]
    %v217 = vld [vmem:[#allocation3 + $0x2c0] sm:$0xf]
    %v218 = vld [vmem:[#allocation3 + $0x2c4] sm:$0xf]
    %v219 = vld [vmem:[#allocation3 + $0x2c8] sm:$0xf]
    %v220 = vld [vmem:[#allocation3 + $0x2cc] sm:$0xf]
    %v221 = vld [vmem:[#allocation3 + $0x2d0] sm:$0xf]
    %v222 = vld [vmem:[#allocation3 + $0x2d4] sm:$0xf]
    %v223 = vld [vmem:[#allocation3 + $0x2d8] sm:$0xf]
    %v224 = vld [vmem:[#allocation3 + $0x2dc] sm:$0xf]
    %v225 = vld [vmem:[#allocation3 + $0x2e0] sm:$0xf]
    %v226 = vld [vmem:[#allocation3 + $0x2e4] sm:$0xf]
    %v227 = vld [vmem:[#allocation3 + $0x2e8] sm:$0xf]
    %v228 = vld [vmem:[#allocation3 + $0x2ec] sm:$0xf]
    %v229 = vld [vmem:[#allocation3 + $0x2f0] sm:$0xf]
    %v230 = vld [vmem:[#allocation3 + $0x2f4] sm:$0xf]
    %v231 = vld [vmem:[#allocation3 + $0x2f8] sm:$0xf]
    %v232 = vld [vmem:[#allocation3 + $0x2fc] sm:$0xf]
    %v233 = vld [vmem:[#allocation3 + $0x300] sm:$0xf]
    %v234 = vld [vmem:[#allocation3 + $0x304] sm:$0xf]
    %v235 = vld [vmem:[#allocation3 + $0x308] sm:$0xf]
    %v236 = vld [vmem:[#allocation3 + $0x30c] sm:$0xf]
    %v237 = vld [vmem:[#allocation3 + $0x310] sm:$0xf]
    %v238 = vld [vmem:[#allocation3 + $0x314] sm:$0xf]
    %v239 = vld [vmem:[#allocation3 + $0x318] sm:$0xf]
    %v240 = vld [vmem:[#allocation3 + $0x31c] sm:$0xf]
    %v241 = vld [vmem:[#allocation3 + $0x320] sm:$0xf]
    %v242 = vld [vmem:[#allocation3 + $0x324] sm:$0xf]
    %v243 = vld [vmem:[#allocation3 + $0x328] sm:$0xf]
    %v244 = vld [vmem:[#allocation3 + $0x32c] sm:$0xf]
    %v245 = vld [vmem:[#allocation3 + $0x330] sm:$0xf]
    %v246 = vld [vmem:[#allocation3 + $0x334] sm:$0xf]
    %v247 = vld [vmem:[#allocation3 + $0x338] sm:$0xf]
    %v248 = vld [vmem:[#allocation3 + $0x33c] sm:$0xf]
    %v249 = vld [vmem:[#allocation3 + $0x340] sm:$0xf]
    %v250 = vld [vmem:[#allocation3 + $0x344] sm:$0xf]
    %v251 = vld [vmem:[#allocation3 + $0x348] sm:$0xf]
    %v252 = vld [vmem:[#allocation3 + $0x34c] sm:$0xf]
    %v253 = vld [vmem:[#allocation3 + $0x350] sm:$0xf]
    %v254 = vld [vmem:[#allocation3 + $0x354] sm:$0xf]
    %v255 = vld [vmem:[#allocation3 + $0x358] sm:$0xf]
    %v256 = vld [vmem:[#allocation3 + $0x35c] sm:$0xf]
    %v257 = vld [vmem:[#allocation3 + $0x360] sm:$0xf]
    %v258 = vld [vmem:[#allocation3 + $0x364] sm:$0xf]
    %v259 = vld [vmem:[#allocation3 + $0x368] sm:$0xf]
    %v260 = vld [vmem:[#allocation3 + $0x36c] sm:$0xf]
    %v261 = vld [vmem:[#allocation3 + $0x370] sm:$0xf]
    %v262 = vld [vmem:[#allocation3 + $0x374] sm:$0xf]
    %v263 = vld [vmem:[#allocation3 + $0x378] sm:$0xf]
    %v264 = vld [vmem:[#allocation3 + $0x37c] sm:$0xf]
    %v265 = vld [vmem:[#allocation3 + $0x380] sm:$0xf]
    %v266 = vld [vmem:[#allocation3 + $0x384] sm:$0xf]
    %v267 = vld [vmem:[#allocation3 + $0x388] sm:$0xf]
    %v268 = vld [vmem:[#allocation3 + $0x38c] sm:$0xf]
    %v269 = vld [vmem:[#allocation3 + $0x390] sm:$0xf]
    %v270 = vld [vmem:[#allocation3 + $0x394] sm:$0xf]
    %v271 = vld [vmem:[#allocation3 + $0x398] sm:$0xf]
    %v272 = vld [vmem:[#allocation3 + $0x39c] sm:$0xf]
    %v273 = vld [vmem:[#allocation3 + $0x3a0] sm:$0xf]
    %v274 = vld [vmem:[#allocation3 + $0x3a4] sm:$0xf]
    %v275 = vld [vmem:[#allocation3 + $0x3a8] sm:$0xf]
    %v276 = vld [vmem:[#allocation3 + $0x3ac] sm:$0xf]
    %v277 = vld [vmem:[#allocation3 + $0x3b0] sm:$0xf]
    %v278 = vld [vmem:[#allocation3 + $0x3b4] sm:$0xf]
    %v279 = vld [vmem:[#allocation3 + $0x3b8] sm:$0xf]
    %v280 = vld [vmem:[#allocation3 + $0x3bc] sm:$0xf]
    %v281 = vld [vmem:[#allocation3 + $0x3c0] sm:$0xf]
    %v282 = vld [vmem:[#allocation3 + $0x3c4] sm:$0xf]
    %v283 = vld [vmem:[#allocation3 + $0x3c8] sm:$0xf]
    %v284 = vld [vmem:[#allocation3 + $0x3cc] sm:$0xf]
    %v285 = vld [vmem:[#allocation3 + $0x3d0] sm:$0xf]
    %v286 = vld [vmem:[#allocation3 + $0x3d4] sm:$0xf]
    %v287 = vld [vmem:[#allocation3 + $0x3d8] sm:$0xf]
    %v288 = vld [vmem:[#allocation3 + $0x3dc] sm:$0xf]
    %v289 = vld [vmem:[#allocation3 + $0x3e0] sm:$0xf]
    %v290 = vld [vmem:[#allocation3 + $0x3e4] sm:$0xf]
    %v291 = vld [vmem:[#allocation3 + $0x3e8] sm:$0xf]
    %v292 = vld [vmem:[#allocation3 + $0x3ec] sm:$0xf]
    %v293 = vld [vmem:[#allocation3 + $0x3f0] sm:$0xf]
    %v294 = vld [vmem:[#allocation3 + $0x3f4] sm:$0xf]
    %v295 = vld [vmem:[#allocation3 + $0x3f8] sm:$0xf]
    %v296 = vld [vmem:[#allocation3 + $0x3fc] sm:$0xf]
    %v297 = vld [vmem:[%s0] sm:$0xff]
    %v298 = vld [vmem:[%s0 + $0x8] sm:$0xff]
    %v299 = vld [vmem:[%s0 + $0x10] sm:$0xff]
    %v300 = vld [vmem:[%s0 + $0x18] sm:$0xff]
    %v305 = vcombine.high %v297, %v297
    %v307 = vunpack.c.l.s4 1983009808
    %v308 = vunpack.c.0.s8 %v307
    %v309 = vlaneseq
    %v310 = vshrl.u32 %v309, 7
    %v311 = vsub.s32 %v308, %v310
    %v312 = vrot.slane %v297, %v311
    %v314 = vunpack.c.l.s4 1983009808
    %v315 = vunpack.c.0.s8 %v314
    %v316 = vlaneseq
    %v317 = vshrl.u32 %v316, 7
    %v318 = vsub.s32 %v315, %v317
    %v319 = vrot.slane %v305, %v318
    %v320 = vcombine.high %v312, %v312
    %v321 = vcombine.high %v319, %v319
    %v322 = vcombine.high %v298, %v298
    %v324 = vunpack.c.l.s4 1983009808
    %v325 = vunpack.c.0.s8 %v324
    %v326 = vlaneseq
    %v327 = vshrl.u32 %v326, 7
    %v328 = vsub.s32 %v325, %v327
    %v329 = vrot.slane %v298, %v328
    %v331 = vunpack.c.l.s4 1983009808
    %v332 = vunpack.c.0.s8 %v331
    %v333 = vlaneseq
    %v334 = vshrl.u32 %v333, 7
    %v335 = vsub.s32 %v332, %v334
    %v336 = vrot.slane %v322, %v335
    %v337 = vcombine.high %v329, %v329
    %v338 = vcombine.high %v336, %v336
    %v339 = vcombine.high %v299, %v299
    %v341 = vunpack.c.l.s4 1983009808
    %v342 = vunpack.c.0.s8 %v341
    %v343 = vlaneseq
    %v344 = vshrl.u32 %v343, 7
    %v345 = vsub.s32 %v342, %v344
    %v346 = vrot.slane %v299, %v345
    %v348 = vunpack.c.l.s4 1983009808
    %v349 = vunpack.c.0.s8 %v348
    %v350 = vlaneseq
    %v351 = vshrl.u32 %v350, 7
    %v352 = vsub.s32 %v349, %v351
    %v353 = vrot.slane %v339, %v352
    %v354 = vcombine.high %v346, %v346
    %v355 = vcombine.high %v353, %v353
    %v356 = vcombine.high %v300, %v300
    %v358 = vunpack.c.l.s4 1983009808
    %v359 = vunpack.c.0.s8 %v358
    %v360 = vlaneseq
    %v361 = vshrl.u32 %v360, 7
    %v362 = vsub.s32 %v359, %v361
    %v363 = vrot.slane %v300, %v362
    %v365 = vunpack.c.l.s4 1983009808
    %v366 = vunpack.c.0.s8 %v365
    %v367 = vlaneseq
    %v368 = vshrl.u32 %v367, 7
    %v369 = vsub.s32 %v366, %v368
    %v370 = vrot.slane %v356, %v369
    %v371 = vcombine.high %v363, %v363
    %v372 = vcombine.high %v370, %v370
    %v389 = vpack.c.bf16 %v312, %v312
    %v390 = vpack.c.bf16 %v320, %v320
    %v391 = vpack.c.bf16 %v319, %v319
    %v392 = vpack.c.bf16 %v321, %v321
    %v393 = vpack.c.bf16 %v329, %v329
    %v394 = vpack.c.bf16 %v337, %v337
    %v395 = vpack.c.bf16 %v336, %v336
    %v396 = vpack.c.bf16 %v338, %v338
    %v397 = vpack.c.bf16 %v346, %v346
    %v398 = vpack.c.bf16 %v354, %v354
    %v399 = vpack.c.bf16 %v353, %v353
    %v400 = vpack.c.bf16 %v355, %v355
    %v401 = vpack.c.bf16 %v363, %v363
    %v402 = vpack.c.bf16 %v371, %v371
    %v403 = vpack.c.bf16 %v370, %v370
    %v404 = vpack.c.bf16 %v372, %v372
    %v405 = vld [vmem:[#allocation2] sm:$0x3]
    %v662 = vunpack.c.l.b16 %v41
    %v663 = vunpack.c.l.b16 %v42
    %v664 = vunpack.c.l.b16 %v43
    %v665 = vunpack.c.l.b16 %v44
    %v666 = vunpack.c.l.b16 %v45
    %v667 = vunpack.c.l.b16 %v46
    %v668 = vunpack.c.l.b16 %v47
    %v669 = vunpack.c.l.b16 %v48
    %v670 = vunpack.c.l.b16 %v49
    %v671 = vunpack.c.l.b16 %v50
    %v672 = vunpack.c.l.b16 %v51
    %v673 = vunpack.c.l.b16 %v52
    %v674 = vunpack.c.l.b16 %v53
    %v675 = vunpack.c.l.b16 %v54
    %v676 = vunpack.c.l.b16 %v55
    %v677 = vunpack.c.l.b16 %v56
    %v678 = vunpack.c.l.b16 %v57
    %v679 = vunpack.c.l.b16 %v58
    %v680 = vunpack.c.l.b16 %v59
    %v681 = vunpack.c.l.b16 %v60
    %v682 = vunpack.c.l.b16 %v61
    %v683 = vunpack.c.l.b16 %v62
    %v684 = vunpack.c.l.b16 %v63
    %v685 = vunpack.c.l.b16 %v64
    %v686 = vunpack.c.l.b16 %v65
    %v687 = vunpack.c.l.b16 %v66
    %v688 = vunpack.c.l.b16 %v67
    %v689 = vunpack.c.l.b16 %v68
    %v690 = vunpack.c.l.b16 %v69
    %v691 = vunpack.c.l.b16 %v70
    %v692 = vunpack.c.l.b16 %v71
    %v693 = vunpack.c.l.b16 %v72
    %v694 = vunpack.c.l.b16 %v73
    %v695 = vunpack.c.l.b16 %v74
    %v696 = vunpack.c.l.b16 %v75
    %v697 = vunpack.c.l.b16 %v76
    %v698 = vunpack.c.l.b16 %v77
    %v699 = vunpack.c.l.b16 %v78
    %v700 = vunpack.c.l.b16 %v79
    %v701 = vunpack.c.l.b16 %v80
    %v702 = vunpack.c.l.b16 %v81
    %v703 = vunpack.c.l.b16 %v82
    %v704 = vunpack.c.l.b16 %v83
    %v705 = vunpack.c.l.b16 %v84
    %v706 = vunpack.c.l.b16 %v85
    %v707 = vunpack.c.l.b16 %v86
    %v708 = vunpack.c.l.b16 %v87
    %v709 = vunpack.c.l.b16 %v88
    %v710 = vunpack.c.l.b16 %v89
    %v711 = vunpack.c.l.b16 %v90
    %v712 = vunpack.c.l.b16 %v91
    %v713 = vunpack.c.l.b16 %v92
    %v714 = vunpack.c.l.b16 %v93
    %v715 = vunpack.c.l.b16 %v94
    %v716 = vunpack.c.l.b16 %v95
    %v717 = vunpack.c.l.b16 %v96
    %v718 = vunpack.c.l.b16 %v97
    %v719 = vunpack.c.l.b16 %v98
    %v720 = vunpack.c.l.b16 %v99
    %v721 = vunpack.c.l.b16 %v100
    %v722 = vunpack.c.l.b16 %v101
    %v723 = vunpack.c.l.b16 %v102
    %v724 = vunpack.c.l.b16 %v103
    %v725 = vunpack.c.l.b16 %v104
    %v726 = vunpack.c.l.b16 %v105
    %v727 = vunpack.c.l.b16 %v106
    %v728 = vunpack.c.l.b16 %v107
    %v729 = vunpack.c.l.b16 %v108
    %v730 = vunpack.c.l.b16 %v109
    %v731 = vunpack.c.l.b16 %v110
    %v732 = vunpack.c.l.b16 %v111
    %v733 = vunpack.c.l.b16 %v112
    %v734 = vunpack.c.l.b16 %v113
    %v735 = vunpack.c.l.b16 %v114
    %v736 = vunpack.c.l.b16 %v115
    %v737 = vunpack.c.l.b16 %v116
    %v738 = vunpack.c.l.b16 %v117
    %v739 = vunpack.c.l.b16 %v118
    %v740 = vunpack.c.l.b16 %v119
    %v741 = vunpack.c.l.b16 %v120
    %v742 = vunpack.c.l.b16 %v121
    %v743 = vunpack.c.l.b16 %v122
    %v744 = vunpack.c.l.b16 %v123
    %v745 = vunpack.c.l.b16 %v124
    %v746 = vunpack.c.l.b16 %v125
    %v747 = vunpack.c.l.b16 %v126
    %v748 = vunpack.c.l.b16 %v127
    %v749 = vunpack.c.l.b16 %v128
    %v750 = vunpack.c.l.b16 %v129
    %v751 = vunpack.c.l.b16 %v130
    %v752 = vunpack.c.l.b16 %v131
    %v753 = vunpack.c.l.b16 %v132
    %v754 = vunpack.c.l.b16 %v133
    %v755 = vunpack.c.l.b16 %v134
    %v756 = vunpack.c.l.b16 %v135
    %v757 = vunpack.c.l.b16 %v136
    %v758 = vunpack.c.l.b16 %v137
    %v759 = vunpack.c.l.b16 %v138
    %v760 = vunpack.c.l.b16 %v139
    %v761 = vunpack.c.l.b16 %v140
    %v762 = vunpack.c.l.b16 %v141
    %v763 = vunpack.c.l.b16 %v142
    %v764 = vunpack.c.l.b16 %v143
    %v765 = vunpack.c.l.b16 %v144
    %v766 = vunpack.c.l.b16 %v145
    %v767 = vunpack.c.l.b16 %v146
    %v768 = vunpack.c.l.b16 %v147
    %v769 = vunpack.c.l.b16 %v148
    %v770 = vunpack.c.l.b16 %v149
    %v771 = vunpack.c.l.b16 %v150
    %v772 = vunpack.c.l.b16 %v151
    %v773 = vunpack.c.l.b16 %v152
    %v774 = vunpack.c.l.b16 %v153
    %v775 = vunpack.c.l.b16 %v154
    %v776 = vunpack.c.l.b16 %v155
    %v777 = vunpack.c.l.b16 %v156
    %v778 = vunpack.c.l.b16 %v157
    %v779 = vunpack.c.l.b16 %v158
    %v780 = vunpack.c.l.b16 %v159
    %v781 = vunpack.c.l.b16 %v160
    %v782 = vunpack.c.l.b16 %v161
    %v783 = vunpack.c.l.b16 %v162
    %v784 = vunpack.c.l.b16 %v163
    %v785 = vunpack.c.l.b16 %v164
    %v786 = vunpack.c.l.b16 %v165
    %v787 = vunpack.c.l.b16 %v166
    %v788 = vunpack.c.l.b16 %v167
    %v789 = vunpack.c.l.b16 %v168
    %v790 = vunpack.c.l.b16 %v169
    %v791 = vunpack.c.l.b16 %v170
    %v792 = vunpack.c.l.b16 %v171
    %v793 = vunpack.c.l.b16 %v172
    %v794 = vunpack.c.l.b16 %v173
    %v795 = vunpack.c.l.b16 %v174
    %v796 = vunpack.c.l.b16 %v175
    %v797 = vunpack.c.l.b16 %v176
    %v798 = vunpack.c.l.b16 %v177
    %v799 = vunpack.c.l.b16 %v178
    %v800 = vunpack.c.l.b16 %v179
    %v801 = vunpack.c.l.b16 %v180
    %v802 = vunpack.c.l.b16 %v181
    %v803 = vunpack.c.l.b16 %v182
    %v804 = vunpack.c.l.b16 %v183
    %v805 = vunpack.c.l.b16 %v184
    %v806 = vunpack.c.l.b16 %v185
    %v807 = vunpack.c.l.b16 %v186
    %v808 = vunpack.c.l.b16 %v187
    %v809 = vunpack.c.l.b16 %v188
    %v810 = vunpack.c.l.b16 %v189
    %v811 = vunpack.c.l.b16 %v190
    %v812 = vunpack.c.l.b16 %v191
    %v813 = vunpack.c.l.b16 %v192
    %v814 = vunpack.c.l.b16 %v193
    %v815 = vunpack.c.l.b16 %v194
    %v816 = vunpack.c.l.b16 %v195
    %v817 = vunpack.c.l.b16 %v196
    %v818 = vunpack.c.l.b16 %v197
    %v819 = vunpack.c.l.b16 %v198
    %v820 = vunpack.c.l.b16 %v199
    %v821 = vunpack.c.l.b16 %v200
    %v822 = vunpack.c.l.b16 %v201
    %v823 = vunpack.c.l.b16 %v202
    %v824 = vunpack.c.l.b16 %v203
    %v825 = vunpack.c.l.b16 %v204
    %v826 = vunpack.c.l.b16 %v205
    %v827 = vunpack.c.l.b16 %v206
    %v828 = vunpack.c.l.b16 %v207
    %v829 = vunpack.c.l.b16 %v208
    %v830 = vunpack.c.l.b16 %v209
    %v831 = vunpack.c.l.b16 %v210
    %v832 = vunpack.c.l.b16 %v211
    %v833 = vunpack.c.l.b16 %v212
    %v834 = vunpack.c.l.b16 %v213
    %v835 = vunpack.c.l.b16 %v214
    %v836 = vunpack.c.l.b16 %v215
    %v837 = vunpack.c.l.b16 %v216
    %v838 = vunpack.c.l.b16 %v217
    %v839 = vunpack.c.l.b16 %v218
    %v840 = vunpack.c.l.b16 %v219
    %v841 = vunpack.c.l.b16 %v220
    %v842 = vunpack.c.l.b16 %v221
    %v843 = vunpack.c.l.b16 %v222
    %v844 = vunpack.c.l.b16 %v223
    %v845 = vunpack.c.l.b16 %v224
    %v846 = vunpack.c.l.b16 %v225
    %v847 = vunpack.c.l.b16 %v226
    %v848 = vunpack.c.l.b16 %v227
    %v849 = vunpack.c.l.b16 %v228
    %v850 = vunpack.c.l.b16 %v229
    %v851 = vunpack.c.l.b16 %v230
    %v852 = vunpack.c.l.b16 %v231
    %v853 = vunpack.c.l.b16 %v232
    %v854 = vunpack.c.l.b16 %v233
    %v855 = vunpack.c.l.b16 %v234
    %v856 = vunpack.c.l.b16 %v235
    %v857 = vunpack.c.l.b16 %v236
    %v858 = vunpack.c.l.b16 %v237
    %v859 = vunpack.c.l.b16 %v238
    %v860 = vunpack.c.l.b16 %v239
    %v861 = vunpack.c.l.b16 %v240
    %v862 = vunpack.c.l.b16 %v241
    %v863 = vunpack.c.l.b16 %v242
    %v864 = vunpack.c.l.b16 %v243
    %v865 = vunpack.c.l.b16 %v244
    %v866 = vunpack.c.l.b16 %v245
    %v867 = vunpack.c.l.b16 %v246
    %v868 = vunpack.c.l.b16 %v247
    %v869 = vunpack.c.l.b16 %v248
    %v870 = vunpack.c.l.b16 %v249
    %v871 = vunpack.c.l.b16 %v250
    %v872 = vunpack.c.l.b16 %v251
    %v873 = vunpack.c.l.b16 %v252
    %v874 = vunpack.c.l.b16 %v253
    %v875 = vunpack.c.l.b16 %v254
    %v876 = vunpack.c.l.b16 %v255
    %v877 = vunpack.c.l.b16 %v256
    %v878 = vunpack.c.l.b16 %v257
    %v879 = vunpack.c.l.b16 %v258
    %v880 = vunpack.c.l.b16 %v259
    %v881 = vunpack.c.l.b16 %v260
    %v882 = vunpack.c.l.b16 %v261
    %v883 = vunpack.c.l.b16 %v262
    %v884 = vunpack.c.l.b16 %v263
    %v885 = vunpack.c.l.b16 %v264
    %v886 = vunpack.c.l.b16 %v265
    %v887 = vunpack.c.l.b16 %v266
    %v888 = vunpack.c.l.b16 %v267
    %v889 = vunpack.c.l.b16 %v268
    %v890 = vunpack.c.l.b16 %v269
    %v891 = vunpack.c.l.b16 %v270
    %v892 = vunpack.c.l.b16 %v271
    %v893 = vunpack.c.l.b16 %v272
    %v894 = vunpack.c.l.b16 %v273
    %v895 = vunpack.c.l.b16 %v274
    %v896 = vunpack.c.l.b16 %v275
    %v897 = vunpack.c.l.b16 %v276
    %v898 = vunpack.c.l.b16 %v277
    %v899 = vunpack.c.l.b16 %v278
    %v900 = vunpack.c.l.b16 %v279
    %v901 = vunpack.c.l.b16 %v280
    %v902 = vunpack.c.l.b16 %v281
    %v903 = vunpack.c.l.b16 %v282
    %v904 = vunpack.c.l.b16 %v283
    %v905 = vunpack.c.l.b16 %v284
    %v906 = vunpack.c.l.b16 %v285
    %v907 = vunpack.c.l.b16 %v286
    %v908 = vunpack.c.l.b16 %v287
    %v909 = vunpack.c.l.b16 %v288
    %v910 = vunpack.c.l.b16 %v289
    %v911 = vunpack.c.l.b16 %v290
    %v912 = vunpack.c.l.b16 %v291
    %v913 = vunpack.c.l.b16 %v292
    %v914 = vunpack.c.l.b16 %v293
    %v915 = vunpack.c.l.b16 %v294
    %v916 = vunpack.c.l.b16 %v295
    %v917 = vunpack.c.l.b16 %v296
    %v918 = vpack.c.b16 %v663, %v662
    %v919 = vpack.c.b16 %v665, %v664
    %v920 = vpack.c.b16 %v667, %v666
    %v921 = vpack.c.b16 %v669, %v668
    %v922 = vpack.c.b16 %v671, %v670
    %v923 = vpack.c.b16 %v673, %v672
    %v924 = vpack.c.b16 %v675, %v674
    %v925 = vpack.c.b16 %v677, %v676
    %v926 = vpack.c.b16 %v679, %v678
    %v927 = vpack.c.b16 %v681, %v680
    %v928 = vpack.c.b16 %v683, %v682
    %v929 = vpack.c.b16 %v685, %v684
    %v930 = vpack.c.b16 %v687, %v686
    %v931 = vpack.c.b16 %v689, %v688
    %v932 = vpack.c.b16 %v691, %v690
    %v933 = vpack.c.b16 %v693, %v692
    %v934 = vpack.c.b16 %v695, %v694
    %v935 = vpack.c.b16 %v697, %v696
    %v936 = vpack.c.b16 %v699, %v698
    %v937 = vpack.c.b16 %v701, %v700
    %v938 = vpack.c.b16 %v703, %v702
    %v939 = vpack.c.b16 %v705, %v704
    %v940 = vpack.c.b16 %v707, %v706
    %v941 = vpack.c.b16 %v709, %v708
    %v942 = vpack.c.b16 %v711, %v710
    %v943 = vpack.c.b16 %v713, %v712
    %v944 = vpack.c.b16 %v715, %v714
    %v945 = vpack.c.b16 %v717, %v716
    %v946 = vpack.c.b16 %v719, %v718
    %v947 = vpack.c.b16 %v721, %v720
    %v948 = vpack.c.b16 %v723, %v722
    %v949 = vpack.c.b16 %v725, %v724
    %v950 = vpack.c.b16 %v727, %v726
    %v951 = vpack.c.b16 %v729, %v728
    %v952 = vpack.c.b16 %v731, %v730
    %v953 = vpack.c.b16 %v733, %v732
    %v954 = vpack.c.b16 %v735, %v734
    %v955 = vpack.c.b16 %v737, %v736
    %v956 = vpack.c.b16 %v739, %v738
    %v957 = vpack.c.b16 %v741, %v740
    %v958 = vpack.c.b16 %v743, %v742
    %v959 = vpack.c.b16 %v745, %v744
    %v960 = vpack.c.b16 %v747, %v746
    %v961 = vpack.c.b16 %v749, %v748
    %v962 = vpack.c.b16 %v751, %v750
    %v963 = vpack.c.b16 %v753, %v752
    %v964 = vpack.c.b16 %v755, %v754
    %v965 = vpack.c.b16 %v757, %v756
    %v966 = vpack.c.b16 %v759, %v758
    %v967 = vpack.c.b16 %v761, %v760
    %v968 = vpack.c.b16 %v763, %v762
    %v969 = vpack.c.b16 %v765, %v764
    %v970 = vpack.c.b16 %v767, %v766
    %v971 = vpack.c.b16 %v769, %v768
    %v972 = vpack.c.b16 %v771, %v770
    %v973 = vpack.c.b16 %v773, %v772
    %v974 = vpack.c.b16 %v775, %v774
    %v975 = vpack.c.b16 %v777, %v776
    %v976 = vpack.c.b16 %v779, %v778
    %v977 = vpack.c.b16 %v781, %v780
    %v978 = vpack.c.b16 %v783, %v782
    %v979 = vpack.c.b16 %v785, %v784
    %v980 = vpack.c.b16 %v787, %v786
    %v981 = vpack.c.b16 %v789, %v788
    %v982 = vpack.c.b16 %v791, %v790
    %v983 = vpack.c.b16 %v793, %v792
    %v984 = vpack.c.b16 %v795, %v794
    %v985 = vpack.c.b16 %v797, %v796
    %v986 = vpack.c.b16 %v799, %v798
    %v987 = vpack.c.b16 %v801, %v800
    %v988 = vpack.c.b16 %v803, %v802
    %v989 = vpack.c.b16 %v805, %v804
    %v990 = vpack.c.b16 %v807, %v806
    %v991 = vpack.c.b16 %v809, %v808
    %v992 = vpack.c.b16 %v811, %v810
    %v993 = vpack.c.b16 %v813, %v812
    %v994 = vpack.c.b16 %v815, %v814
    %v995 = vpack.c.b16 %v817, %v816
    %v996 = vpack.c.b16 %v819, %v818
    %v997 = vpack.c.b16 %v821, %v820
    %v998 = vpack.c.b16 %v823, %v822
    %v999 = vpack.c.b16 %v825, %v824
    %v1000 = vpack.c.b16 %v827, %v826
    %v1001 = vpack.c.b16 %v829, %v828
    %v1002 = vpack.c.b16 %v831, %v830
    %v1003 = vpack.c.b16 %v833, %v832
    %v1004 = vpack.c.b16 %v835, %v834
    %v1005 = vpack.c.b16 %v837, %v836
    %v1006 = vpack.c.b16 %v839, %v838
    %v1007 = vpack.c.b16 %v841, %v840
    %v1008 = vpack.c.b16 %v843, %v842
    %v1009 = vpack.c.b16 %v845, %v844
    %v1010 = vpack.c.b16 %v847, %v846
    %v1011 = vpack.c.b16 %v849, %v848
    %v1012 = vpack.c.b16 %v851, %v850
    %v1013 = vpack.c.b16 %v853, %v852
    %v1014 = vpack.c.b16 %v855, %v854
    %v1015 = vpack.c.b16 %v857, %v856
    %v1016 = vpack.c.b16 %v859, %v858
    %v1017 = vpack.c.b16 %v861, %v860
    %v1018 = vpack.c.b16 %v863, %v862
    %v1019 = vpack.c.b16 %v865, %v864
    %v1020 = vpack.c.b16 %v867, %v866
    %v1021 = vpack.c.b16 %v869, %v868
    %v1022 = vpack.c.b16 %v871, %v870
    %v1023 = vpack.c.b16 %v873, %v872
    %v1024 = vpack.c.b16 %v875, %v874
    %v1025 = vpack.c.b16 %v877, %v876
    %v1026 = vpack.c.b16 %v879, %v878
    %v1027 = vpack.c.b16 %v881, %v880
    %v1028 = vpack.c.b16 %v883, %v882
    %v1029 = vpack.c.b16 %v885, %v884
    %v1030 = vpack.c.b16 %v887, %v886
    %v1031 = vpack.c.b16 %v889, %v888
    %v1032 = vpack.c.b16 %v891, %v890
    %v1033 = vpack.c.b16 %v893, %v892
    %v1034 = vpack.c.b16 %v895, %v894
    %v1035 = vpack.c.b16 %v897, %v896
    %v1036 = vpack.c.b16 %v899, %v898
    %v1037 = vpack.c.b16 %v901, %v900
    %v1038 = vpack.c.b16 %v903, %v902
    %v1039 = vpack.c.b16 %v905, %v904
    %v1040 = vpack.c.b16 %v907, %v906
    %v1041 = vpack.c.b16 %v909, %v908
    %v1042 = vpack.c.b16 %v911, %v910
    %v1043 = vpack.c.b16 %v913, %v912
    %v1044 = vpack.c.b16 %v915, %v914
    %v1045 = vpack.c.b16 %v917, %v916
    %1174 = vmatprep.subr.bf16.mxu0 0
    %1175 = vmatpush1.bf16.msra.mxu0 %v918
    %1176 = vmatprep.subr.bf16.mxu0 0
    %1177 = vmatpush1.bf16.msra.mxu0 %v919
    %1178 = vmatprep.subr.bf16.mxu0 0
    %1179 = vmatpush1.bf16.msra.mxu0 %v920
    %1180 = vmatprep.subr.bf16.mxu0 0
    %1181 = vmatpush1.bf16.msra.mxu0 %v921
    %1182 = vmatprep.subr.bf16.mxu0 0
    %1183 = vmatpush1.bf16.msra.mxu0 %v922
    %1184 = vmatprep.subr.bf16.mxu0 0
    %1185 = vmatpush1.bf16.msra.mxu0 %v923
    %1186 = vmatprep.subr.bf16.mxu0 0
    %1187 = vmatpush1.bf16.msra.mxu0 %v924
    %1188 = vmatprep.subr.bf16.mxu0 0
    %1189 = vmatpush1.bf16.msra.mxu0 %v925
    %1190 = vmatprep.subr.bf16.mxu0 0
    %1191 = vmatpush1.bf16.msra.mxu0 %v926
    %1192 = vmatprep.subr.bf16.mxu0 0
    %1193 = vmatpush1.bf16.msra.mxu0 %v927
    %1194 = vmatprep.subr.bf16.mxu0 0
    %1195 = vmatpush1.bf16.msra.mxu0 %v928
    %1196 = vmatprep.subr.bf16.mxu0 0
    %1197 = vmatpush1.bf16.msra.mxu0 %v929
    %1198 = vmatprep.subr.bf16.mxu0 0
    %1199 = vmatpush1.bf16.msra.mxu0 %v930
    %1200 = vmatprep.subr.bf16.mxu0 0
    %1201 = vmatpush1.bf16.msra.mxu0 %v931
    %1202 = vmatprep.subr.bf16.mxu0 0
    %1203 = vmatpush1.bf16.msra.mxu0 %v932
    %1204 = vmatprep.subr.bf16.mxu0 0
    %1205 = vmatpush1.bf16.msra.mxu0 %v933
    %1206 = vmatprep.mubr.bf16.mxu0 %v390
    %1207 = vmatmul.mubr.bf16.gmra.mrb[0].mxu0 %v389
    %v1208 = vpop.f32.mrb[0].mxu0
    %v1209 = vadd.f32 0.0, %v1208
    %v1210 = vpop.f32.mrb[0].mxu0
    %v1211 = vpop.f32.mrb[0].mxu0
    %v1212 = vpop.f32.mrb[0].mxu0
    %1213 = vdwg.mxu0
    %1214 = vmatprep.subr.bf16.mxu0 0
    %1215 = vmatpush1.bf16.msra.mxu0 %v934
    %1216 = vmatprep.subr.bf16.mxu0 0
    %1217 = vmatpush1.bf16.msra.mxu0 %v935
    %1218 = vmatprep.subr.bf16.mxu0 0
    %1219 = vmatpush1.bf16.msra.mxu0 %v936
    %1220 = vmatprep.subr.bf16.mxu0 0
    %1221 = vmatpush1.bf16.msra.mxu0 %v937
    %1222 = vmatprep.subr.bf16.mxu0 0
    %1223 = vmatpush1.bf16.msra.mxu0 %v938
    %1224 = vmatprep.subr.bf16.mxu0 0
    %1225 = vmatpush1.bf16.msra.mxu0 %v939
    %1226 = vmatprep.subr.bf16.mxu0 0
    %1227 = vmatpush1.bf16.msra.mxu0 %v940
    %1228 = vmatprep.subr.bf16.mxu0 0
    %1229 = vmatpush1.bf16.msra.mxu0 %v941
    %1230 = vmatprep.subr.bf16.mxu0 0
    %1231 = vmatpush1.bf16.msra.mxu0 %v942
    %1232 = vmatprep.subr.bf16.mxu0 0
    %1233 = vmatpush1.bf16.msra.mxu0 %v943
    %1234 = vmatprep.subr.bf16.mxu0 0
    %1235 = vmatpush1.bf16.msra.mxu0 %v944
    %1236 = vmatprep.subr.bf16.mxu0 0
    %1237 = vmatpush1.bf16.msra.mxu0 %v945
    %1238 = vmatprep.subr.bf16.mxu0 0
    %1239 = vmatpush1.bf16.msra.mxu0 %v946
    %1240 = vmatprep.subr.bf16.mxu0 0
    %1241 = vmatpush1.bf16.msra.mxu0 %v947
    %1242 = vmatprep.subr.bf16.mxu0 0
    %1243 = vmatpush1.bf16.msra.mxu0 %v948
    %1244 = vmatprep.subr.bf16.mxu0 0
    %1245 = vmatpush1.bf16.msra.mxu0 %v949
    %1246 = vmatprep.mubr.bf16.mxu0 %v392
    %1247 = vmatmul.mubr.bf16.gmra.mrb[0].mxu0 %v391
    %v1248 = vpop.f32.mrb[0].mxu0
    %v1249 = vadd.f32 %v1209, %v1248
    %v1250 = vpop.f32.mrb[0].mxu0
    %v1251 = vpop.f32.mrb[0].mxu0
    %v1252 = vpop.f32.mrb[0].mxu0
    %1253 = vdwg.mxu0
    %1254 = vmatprep.subr.bf16.mxu0 0
    %1255 = vmatpush1.bf16.msra.mxu0 %v950
    %1256 = vmatprep.subr.bf16.mxu0 0
    %1257 = vmatpush1.bf16.msra.mxu0 %v951
    %1258 = vmatprep.subr.bf16.mxu0 0
    %1259 = vmatpush1.bf16.msra.mxu0 %v952
    %1260 = vmatprep.subr.bf16.mxu0 0
    %1261 = vmatpush1.bf16.msra.mxu0 %v953
    %1262 = vmatprep.subr.bf16.mxu0 0
    %1263 = vmatpush1.bf16.msra.mxu0 %v954
    %1264 = vmatprep.subr.bf16.mxu0 0
    %1265 = vmatpush1.bf16.msra.mxu0 %v955
    %1266 = vmatprep.subr.bf16.mxu0 0
    %1267 = vmatpush1.bf16.msra.mxu0 %v956
    %1268 = vmatprep.subr.bf16.mxu0 0
    %1269 = vmatpush1.bf16.msra.mxu0 %v957
    %1270 = vmatprep.subr.bf16.mxu0 0
    %1271 = vmatpush1.bf16.msra.mxu0 %v958
    %1272 = vmatprep.subr.bf16.mxu0 0
    %1273 = vmatpush1.bf16.msra.mxu0 %v959
    %1274 = vmatprep.subr.bf16.mxu0 0
    %1275 = vmatpush1.bf16.msra.mxu0 %v960
    %1276 = vmatprep.subr.bf16.mxu0 0
    %1277 = vmatpush1.bf16.msra.mxu0 %v961
    %1278 = vmatprep.subr.bf16.mxu0 0
    %1279 = vmatpush1.bf16.msra.mxu0 %v962
    %1280 = vmatprep.subr.bf16.mxu0 0
    %1281 = vmatpush1.bf16.msra.mxu0 %v963
    %1282 = vmatprep.subr.bf16.mxu0 0
    %1283 = vmatpush1.bf16.msra.mxu0 %v964
    %1284 = vmatprep.subr.bf16.mxu0 0
    %1285 = vmatpush1.bf16.msra.mxu0 %v965
    %1286 = vmatprep.mubr.bf16.mxu0 %v394
    %1287 = vmatmul.mubr.bf16.gmra.mrb[0].mxu0 %v393
    %v1288 = vpop.f32.mrb[0].mxu0
    %v1289 = vadd.f32 %v1249, %v1288
    %v1290 = vpop.f32.mrb[0].mxu0
    %v1291 = vpop.f32.mrb[0].mxu0
    %v1292 = vpop.f32.mrb[0].mxu0
    %1293 = vdwg.mxu0
    %1294 = vmatprep.subr.bf16.mxu0 0
    %1295 = vmatpush1.bf16.msra.mxu0 %v966
    %1296 = vmatprep.subr.bf16.mxu0 0
    %1297 = vmatpush1.bf16.msra.mxu0 %v967
    %1298 = vmatprep.subr.bf16.mxu0 0
    %1299 = vmatpush1.bf16.msra.mxu0 %v968
    %1300 = vmatprep.subr.bf16.mxu0 0
    %1301 = vmatpush1.bf16.msra.mxu0 %v969
    %1302 = vmatprep.subr.bf16.mxu0 0
    %1303 = vmatpush1.bf16.msra.mxu0 %v970
    %1304 = vmatprep.subr.bf16.mxu0 0
    %1305 = vmatpush1.bf16.msra.mxu0 %v971
    %1306 = vmatprep.subr.bf16.mxu0 0
    %1307 = vmatpush1.bf16.msra.mxu0 %v972
    %1308 = vmatprep.subr.bf16.mxu0 0
    %1309 = vmatpush1.bf16.msra.mxu0 %v973
    %1310 = vmatprep.subr.bf16.mxu0 0
    %1311 = vmatpush1.bf16.msra.mxu0 %v974
    %1312 = vmatprep.subr.bf16.mxu0 0
    %1313 = vmatpush1.bf16.msra.mxu0 %v975
    %1314 = vmatprep.subr.bf16.mxu0 0
    %1315 = vmatpush1.bf16.msra.mxu0 %v976
    %1316 = vmatprep.subr.bf16.mxu0 0
    %1317 = vmatpush1.bf16.msra.mxu0 %v977
    %1318 = vmatprep.subr.bf16.mxu0 0
    %1319 = vmatpush1.bf16.msra.mxu0 %v978
    %1320 = vmatprep.subr.bf16.mxu0 0
    %1321 = vmatpush1.bf16.msra.mxu0 %v979
    %1322 = vmatprep.subr.bf16.mxu0 0
    %1323 = vmatpush1.bf16.msra.mxu0 %v980
    %1324 = vmatprep.subr.bf16.mxu0 0
    %1325 = vmatpush1.bf16.msra.mxu0 %v981
    %1326 = vmatprep.mubr.bf16.mxu0 %v396
    %1327 = vmatmul.mubr.bf16.gmra.mrb[0].mxu0 %v395
    %v1328 = vpop.f32.mrb[0].mxu0
    %v1329 = vadd.f32 %v1289, %v1328
    %v1330 = vpop.f32.mrb[0].mxu0
    %v1331 = vpop.f32.mrb[0].mxu0
    %v1332 = vpop.f32.mrb[0].mxu0
    %1333 = vdwg.mxu0
    %1334 = vmatprep.subr.bf16.mxu0 0
    %1335 = vmatpush1.bf16.msra.mxu0 %v982
    %1336 = vmatprep.subr.bf16.mxu0 0
    %1337 = vmatpush1.bf16.msra.mxu0 %v983
    %1338 = vmatprep.subr.bf16.mxu0 0
    %1339 = vmatpush1.bf16.msra.mxu0 %v984
    %1340 = vmatprep.subr.bf16.mxu0 0
    %1341 = vmatpush1.bf16.msra.mxu0 %v985
    %1342 = vmatprep.subr.bf16.mxu0 0
    %1343 = vmatpush1.bf16.msra.mxu0 %v986
    %1344 = vmatprep.subr.bf16.mxu0 0
    %1345 = vmatpush1.bf16.msra.mxu0 %v987
    %1346 = vmatprep.subr.bf16.mxu0 0
    %1347 = vmatpush1.bf16.msra.mxu0 %v988
    %1348 = vmatprep.subr.bf16.mxu0 0
    %1349 = vmatpush1.bf16.msra.mxu0 %v989
    %1350 = vmatprep.subr.bf16.mxu0 0
    %1351 = vmatpush1.bf16.msra.mxu0 %v990
    %1352 = vmatprep.subr.bf16.mxu0 0
    %1353 = vmatpush1.bf16.msra.mxu0 %v991
    %1354 = vmatprep.subr.bf16.mxu0 0
    %1355 = vmatpush1.bf16.msra.mxu0 %v992
    %1356 = vmatprep.subr.bf16.mxu0 0
    %1357 = vmatpush1.bf16.msra.mxu0 %v993
    %1358 = vmatprep.subr.bf16.mxu0 0
    %1359 = vmatpush1.bf16.msra.mxu0 %v994
    %1360 = vmatprep.subr.bf16.mxu0 0
    %1361 = vmatpush1.bf16.msra.mxu0 %v995
    %1362 = vmatprep.subr.bf16.mxu0 0
    %1363 = vmatpush1.bf16.msra.mxu0 %v996
    %1364 = vmatprep.subr.bf16.mxu0 0
    %1365 = vmatpush1.bf16.msra.mxu0 %v997
    %1366 = vmatprep.mubr.bf16.mxu0 %v398
    %1367 = vmatmul.mubr.bf16.gmra.mrb[0].mxu0 %v397
    %v1368 = vpop.f32.mrb[0].mxu0
    %v1369 = vadd.f32 %v1329, %v1368
    %v1370 = vpop.f32.mrb[0].mxu0
    %v1371 = vpop.f32.mrb[0].mxu0
    %v1372 = vpop.f32.mrb[0].mxu0
    %1373 = vdwg.mxu0
    %1374 = vmatprep.subr.bf16.mxu0 0
    %1375 = vmatpush1.bf16.msra.mxu0 %v998
    %1376 = vmatprep.subr.bf16.mxu0 0
    %1377 = vmatpush1.bf16.msra.mxu0 %v999
    %1378 = vmatprep.subr.bf16.mxu0 0
    %1379 = vmatpush1.bf16.msra.mxu0 %v1000
    %1380 = vmatprep.subr.bf16.mxu0 0
    %1381 = vmatpush1.bf16.msra.mxu0 %v1001
    %1382 = vmatprep.subr.bf16.mxu0 0
    %1383 = vmatpush1.bf16.msra.mxu0 %v1002
    %1384 = vmatprep.subr.bf16.mxu0 0
    %1385 = vmatpush1.bf16.msra.mxu0 %v1003
    %1386 = vmatprep.subr.bf16.mxu0 0
    %1387 = vmatpush1.bf16.msra.mxu0 %v1004
    %1388 = vmatprep.subr.bf16.mxu0 0
    %1389 = vmatpush1.bf16.msra.mxu0 %v1005
    %1390 = vmatprep.subr.bf16.mxu0 0
    %1391 = vmatpush1.bf16.msra.mxu0 %v1006
    %1392 = vmatprep.subr.bf16.mxu0 0
    %1393 = vmatpush1.bf16.msra.mxu0 %v1007
    %1394 = vmatprep.subr.bf16.mxu0 0
    %1395 = vmatpush1.bf16.msra.mxu0 %v1008
    %1396 = vmatprep.subr.bf16.mxu0 0
    %1397 = vmatpush1.bf16.msra.mxu0 %v1009
    %1398 = vmatprep.subr.bf16.mxu0 0
    %1399 = vmatpush1.bf16.msra.mxu0 %v1010
    %1400 = vmatprep.subr.bf16.mxu0 0
    %1401 = vmatpush1.bf16.msra.mxu0 %v1011
    %1402 = vmatprep.subr.bf16.mxu0 0
    %1403 = vmatpush1.bf16.msra.mxu0 %v1012
    %1404 = vmatprep.subr.bf16.mxu0 0
    %1405 = vmatpush1.bf16.msra.mxu0 %v1013
    %1406 = vmatprep.mubr.bf16.mxu0 %v400
    %1407 = vmatmul.mubr.bf16.gmra.mrb[0].mxu0 %v399
    %v1408 = vpop.f32.mrb[0].mxu0
    %v1409 = vadd.f32 %v1369, %v1408
    %v1410 = vpop.f32.mrb[0].mxu0
    %v1411 = vpop.f32.mrb[0].mxu0
    %v1412 = vpop.f32.mrb[0].mxu0
    %1413 = vdwg.mxu0
    %1414 = vmatprep.subr.bf16.mxu0 0
    %1415 = vmatpush1.bf16.msra.mxu0 %v1014
    %1416 = vmatprep.subr.bf16.mxu0 0
    %1417 = vmatpush1.bf16.msra.mxu0 %v1015
    %1418 = vmatprep.subr.bf16.mxu0 0
    %1419 = vmatpush1.bf16.msra.mxu0 %v1016
    %1420 = vmatprep.subr.bf16.mxu0 0
    %1421 = vmatpush1.bf16.msra.mxu0 %v1017
    %1422 = vmatprep.subr.bf16.mxu0 0
    %1423 = vmatpush1.bf16.msra.mxu0 %v1018
    %1424 = vmatprep.subr.bf16.mxu0 0
    %1425 = vmatpush1.bf16.msra.mxu0 %v1019
    %1426 = vmatprep.subr.bf16.mxu0 0
    %1427 = vmatpush1.bf16.msra.mxu0 %v1020
    %1428 = vmatprep.subr.bf16.mxu0 0
    %1429 = vmatpush1.bf16.msra.mxu0 %v1021
    %1430 = vmatprep.subr.bf16.mxu0 0
    %1431 = vmatpush1.bf16.msra.mxu0 %v1022
    %1432 = vmatprep.subr.bf16.mxu0 0
    %1433 = vmatpush1.bf16.msra.mxu0 %v1023
    %1434 = vmatprep.subr.bf16.mxu0 0
    %1435 = vmatpush1.bf16.msra.mxu0 %v1024
    %1436 = vmatprep.subr.bf16.mxu0 0
    %1437 = vmatpush1.bf16.msra.mxu0 %v1025
    %1438 = vmatprep.subr.bf16.mxu0 0
    %1439 = vmatpush1.bf16.msra.mxu0 %v1026
    %1440 = vmatprep.subr.bf16.mxu0 0
    %1441 = vmatpush1.bf16.msra.mxu0 %v1027
    %1442 = vmatprep.subr.bf16.mxu0 0
    %1443 = vmatpush1.bf16.msra.mxu0 %v1028
    %1444 = vmatprep.subr.bf16.mxu0 0
    %1445 = vmatpush1.bf16.msra.mxu0 %v1029
    %1446 = vmatprep.mubr.bf16.mxu0 %v402
    %1447 = vmatmul.mubr.bf16.gmra.mrb[0].mxu0 %v401
    %v1448 = vpop.f32.mrb[0].mxu0
    %v1449 = vadd.f32 %v1409, %v1448
    %v1450 = vpop.f32.mrb[0].mxu0
    %v1451 = vpop.f32.mrb[0].mxu0
    %v1452 = vpop.f32.mrb[0].mxu0
    %1453 = vdwg.mxu0
    %1454 = vmatprep.subr.bf16.mxu0 0
    %1455 = vmatpush1.bf16.msra.mxu0 %v1030
    %1456 = vmatprep.subr.bf16.mxu0 0
    %1457 = vmatpush1.bf16.msra.mxu0 %v1031
    %1458 = vmatprep.subr.bf16.mxu0 0
    %1459 = vmatpush1.bf16.msra.mxu0 %v1032
    %1460 = vmatprep.subr.bf16.mxu0 0
    %1461 = vmatpush1.bf16.msra.mxu0 %v1033
    %1462 = vmatprep.subr.bf16.mxu0 0
    %1463 = vmatpush1.bf16.msra.mxu0 %v1034
    %1464 = vmatprep.subr.bf16.mxu0 0
    %1465 = vmatpush1.bf16.msra.mxu0 %v1035
    %1466 = vmatprep.subr.bf16.mxu0 0
    %1467 = vmatpush1.bf16.msra.mxu0 %v1036
    %1468 = vmatprep.subr.bf16.mxu0 0
    %1469 = vmatpush1.bf16.msra.mxu0 %v1037
    %1470 = vmatprep.subr.bf16.mxu0 0
    %1471 = vmatpush1.bf16.msra.mxu0 %v1038
    %1472 = vmatprep.subr.bf16.mxu0 0
    %1473 = vmatpush1.bf16.msra.mxu0 %v1039
    %1474 = vmatprep.subr.bf16.mxu0 0
    %1475 = vmatpush1.bf16.msra.mxu0 %v1040
    %1476 = vmatprep.subr.bf16.mxu0 0
    %1477 = vmatpush1.bf16.msra.mxu0 %v1041
    %1478 = vmatprep.subr.bf16.mxu0 0
    %1479 = vmatpush1.bf16.msra.mxu0 %v1042
    %1480 = vmatprep.subr.bf16.mxu0 0
    %1481 = vmatpush1.bf16.msra.mxu0 %v1043
    %1482 = vmatprep.subr.bf16.mxu0 0
    %1483 = vmatpush1.bf16.msra.mxu0 %v1044
    %1484 = vmatprep.subr.bf16.mxu0 0
    %1485 = vmatpush1.bf16.msra.mxu0 %v1045
    %1486 = vmatprep.mubr.bf16.mxu0 %v404
    %1487 = vmatmul.mubr.bf16.gmra.mrb[0].mxu0 %v403
    %v1488 = vpop.f32.mrb[0].mxu0
    %v1489 = vadd.f32 %v1449, %v1488
    %v1490 = vpop.f32.mrb[0].mxu0
    %v1491 = vpop.f32.mrb[0].mxu0
    %v1492 = vpop.f32.mrb[0].mxu0
    %1493 = vdwg.mxu0
    %v1494 = vadd.f32 %v405, %v1489
    %1495 = vst [vmem:[#allocation2] sm:$0x3] %v1494
    // Predicated region
    $region30: #{tpu_custom_call.1} parent=1 // pred_check
      %p1496 = pneg %p36
    $region31: #{tpu_custom_call.1} parent=1 // pred_check_branch
      %1498 = sbr.rel (%p1496) target = $region33
    $region32: #{tpu_custom_call.1} parent=1 // pred_region
      %v1499 = vld [vmem:[#allocation2] sm:$0x3]
      %v1500 = vld [vmem:[%s2] sm:$0x1]
      %v1502 = vlaneseq
      %v1503 = vshrl.u32 %v1502, 7
      %v1504 = vsub.s32 0, %v1503
      %v1505 = vrot.slane %v1500, %v1504
      %v1507 = vadd.f32 %v1499, %v1505
      %v1508 = vld [vmem:[%s3] sm:$0xff]
      %v1509 = vld [vmem:[%s3 + $0x8] sm:$0xff]
      %v1510 = vld [vmem:[%s3 + $0x10] sm:$0xff]
      %v1511 = vld [vmem:[%s3 + $0x18] sm:$0xff]
      %v1512 = vld [vmem:[%s3 + $0x20] sm:$0xff]
      %v1513 = vld [vmem:[%s3 + $0x28] sm:$0xff]
      %v1514 = vld [vmem:[%s3 + $0x30] sm:$0xff]
      %v1515 = vld [vmem:[%s3 + $0x38] sm:$0xff]
      %v1516 = vld [vmem:[%s3 + $0x40] sm:$0xff]
      %v1517 = vld [vmem:[%s3 + $0x48] sm:$0xff]
      %v1518 = vld [vmem:[%s3 + $0x50] sm:$0xff]
      %v1519 = vld [vmem:[%s3 + $0x58] sm:$0xff]
      %v1520 = vld [vmem:[%s3 + $0x60] sm:$0xff]
      %v1521 = vld [vmem:[%s3 + $0x68] sm:$0xff]
      %v1522 = vld [vmem:[%s3 + $0x70] sm:$0xff]
      %v1523 = vld [vmem:[%s3 + $0x78] sm:$0xff]
      %v1524 = vld [vmem:[%s4] sm:$0x1]
      %v1526 = vlaneseq
      %v1527 = vshrl.u32 %v1526, 7
      %v1528 = vsub.s32 0, %v1527
      %v1529 = vrot.slane %v1524, %v1528
      %1531 = vmatprep.subr.mxu0 0.0
      %1532 = vmatpush1.msra.mxu0 %v1508
      %1533 = vmatprep.subr.mxu0 0.0
      %1534 = vmatpush1.msra.mxu0 %v1509
      %1535 = vmatprep.subr.mxu0 0.0
      %1536 = vmatpush1.msra.mxu0 %v1510
      %1537 = vmatprep.subr.mxu0 0.0
      %1538 = vmatpush1.msra.mxu0 %v1511
      %1539 = vmatprep.subr.mxu0 0.0
      %1540 = vmatpush1.msra.mxu0 %v1512
      %1541 = vmatprep.subr.mxu0 0.0
      %1542 = vmatpush1.msra.mxu0 %v1513
      %1543 = vmatprep.subr.mxu0 0.0
      %1544 = vmatpush1.msra.mxu0 %v1514
      %1545 = vmatprep.subr.mxu0 0.0
      %1546 = vmatpush1.msra.mxu0 %v1515
      %1547 = vmatprep.subr.mxu0 0.0
      %1548 = vmatpush1.msra.mxu0 %v1516
      %1549 = vmatprep.subr.mxu0 0.0
      %1550 = vmatpush1.msra.mxu0 %v1517
      %1551 = vmatprep.subr.mxu0 0.0
      %1552 = vmatpush1.msra.mxu0 %v1518
      %1553 = vmatprep.subr.mxu0 0.0
      %1554 = vmatpush1.msra.mxu0 %v1519
      %1555 = vmatprep.subr.mxu0 0.0
      %1556 = vmatpush1.msra.mxu0 %v1520
      %1557 = vmatprep.subr.mxu0 0.0
      %1558 = vmatpush1.msra.mxu0 %v1521
      %1559 = vmatprep.subr.mxu0 0.0
      %1560 = vmatpush1.msra.mxu0 %v1522
      %1561 = vmatprep.subr.mxu0 0.0
      %1562 = vmatpush1.msra.mxu0 %v1523
      %1563 = vmatprep.subr.mxu0 0.0
      %1564 = vmatpush1.msra.mxu0 0.0
      %1565 = vmatprep.subr.mxu0 0.0
      %1566 = vmatpush1.msra.mxu0 0.0
      %1567 = vmatprep.subr.mxu0 0.0
      %1568 = vmatpush1.msra.mxu0 0.0
      %1569 = vmatprep.subr.mxu0 0.0
      %1570 = vmatpush1.msra.mxu0 0.0
      %1571 = vmatprep.subr.mxu0 0.0
      %1572 = vmatpush1.msra.mxu0 0.0
      %1573 = vmatprep.subr.mxu0 0.0
      %1574 = vmatpush1.msra.mxu0 0.0
      %1575 = vmatprep.subr.mxu0 0.0
      %1576 = vmatpush1.msra.mxu0 0.0
      %1577 = vmatprep.subr.mxu0 0.0
      %1578 = vmatpush1.msra.mxu0 0.0
      %1579 = vmatprep.subr.mxu0 0.0
      %1580 = vmatpush1.msra.mxu0 0.0
      %1581 = vmatprep.subr.mxu0 0.0
      %1582 = vmatpush1.msra.mxu0 0.0
      %1583 = vmatprep.subr.mxu0 0.0
      %1584 = vmatpush1.msra.mxu0 0.0
      %1585 = vmatprep.subr.mxu0 0.0
      %1586 = vmatpush1.msra.mxu0 0.0
      %1587 = vmatprep.subr.mxu0 0.0
      %1588 = vmatpush1.msra.mxu0 0.0
      %1589 = vmatprep.subr.mxu0 0.0
      %1590 = vmatpush1.msra.mxu0 0.0
      %1591 = vmatprep.subr.mxu0 0.0
      %1592 = vmatpush1.msra.mxu0 0.0
      %1593 = vmatprep.subr.mxu0 0.0
      %1594 = vmatpush1.msra.mxu0 0.0
      %1595 = vmatprep.mubr.f32.mxu0 0.0
      %1596 = vmatmul.mubr.f32.gmra.mrb[0].mxu0 %v1507
      %v1597 = vpop.f32.mrb[0].mxu0
      %v1598 = vadd.f32 %v1529, %v1597
      %v1599 = vpop.f32.mrb[0].mxu0
      %1600 = vdwg.mxu0
      %v1601 = vxor.u32 %v1598, 2147483648
      %v1602 = vmul.f32 %v1601, 1.442695
      %v1603 = vpow.pop %v1602
      %v1604 = vadd.f32 %v1603, 1.0
      %v1605 = vrcp.pop %v1604
      %v1606 = vmul.f32 1.0, %v1605
      %vm1607 = vcmask 25600
      %1608 = vst.msk [vmem:[#allocation6] sm:$0x3] %vm1607, %v1606
    $region33: #{tpu_custom_call.1} parent=1 // pred_fallthru
      _
    // Predicated region
    $region34: #{tpu_custom_call.1} parent=1 // pred_check
      _
    $region35: #{tpu_custom_call.1} parent=1 // pred_check_branch
      %1610 = sbr.rel (0) target = $region37
    $region36: #{tpu_custom_call.1} parent=1 // pred_region
      %s1612 = ssub.s32 32, 32
      %1613 = vsyncadd [#allocation5], %s1612
      %s1615 = sshll.u32 [#allocation6], 4
      %s1616 = int_to_ptr.vmem [resolvable:$true] %s1615
      %1618 = dma.vmem_to_hbm [thread:$0]  %s1616, 32, %s5, [#allocation5]
    $region37: #{tpu_custom_call.1} parent=1 // pred_fallthru
      _
    // Predicated region
    $region38: #{tpu_custom_call.1} parent=1 // pred_check
      _
    $region39: #{tpu_custom_call.1} parent=1 // pred_check_branch
      %1620 = sbr.rel (0) target = $region41
    $region40: #{tpu_custom_call.1} parent=1 // pred_region
      %1621 = dma.done [#allocation5], 32
    $region41: #{tpu_custom_call.1} parent=1 // pred_fallthru
      _
    %1622 = vsyncpa [#allocation4], 1
    %1623 = vsyncpa [#allocation5], 1

</llo_original>
